<compile_context>
chip_gen: v5e
topology: v5e:2x2
jax: 0.10.0
libtpu: 0.0.40
codegen_flags: <defaults>
</compile_context>

<pallas_src>
import jax
import jax.numpy as jnp
import numpy as np
from jax.experimental import pallas as pl
from jax.experimental.pallas import tpu as pltpu

HS = 32  # the module's `hs` (only exposed via output_embedding_size)


# ----------------------------------------------------------------------------
# Optional kernel-boundary path: one HBM->HBM DMA (identity copy).
# ----------------------------------------------------------------------------
def _dma_identity_kernel(x_hbm, o_hbm, sem):
    # Whole-array HBM->HBM copy; no VMEM round-trip, no vld/vst loop.
    cp = pltpu.make_async_copy(x_hbm, o_hbm, sem)
    cp.start()
    cp.wait()


def _pallas_identity_dma(x):
    """Identity copy of `x` via a single DMA, leaving data in HBM throughout."""
    # DMA wants at least 1-D; 0-d scalars are reshaped (and restored below).
    orig_shape = x.shape
    xr = x.reshape(1) if x.ndim == 0 else x
    out = pl.pallas_call(
        _dma_identity_kernel,
        out_shape=jax.ShapeDtypeStruct(xr.shape, xr.dtype),
        in_specs=[pl.BlockSpec(memory_space=pl.ANY)],
        out_specs=pl.BlockSpec(memory_space=pl.ANY),
        scratch_shapes=[pltpu.SemaphoreType.DMA(())],
    )(xr)
    return out.reshape(orig_shape)


# ----------------------------------------------------------------------------
# Module forward (identity on inp_embed; extra args/kwargs ignored, as in the
# original nn.Module).
# ----------------------------------------------------------------------------
def do_not_augment_with_trace_forward(inp_embed, *args, force_kernel=False, **kwargs):
    if not force_kernel:
        # Pure pass-through: the optimal realization is no work at all.
        return inp_embed
    # Kernel boundary explicitly requested: single HBM->HBM DMA copy.
    return _pallas_identity_dma(inp_embed)


def output_embedding_size(hs=HS):
    # Mirrors the module's `output_embedding_size` property.
    return hs


if __name__ == "__main__":
    key = jax.random.PRNGKey(0)

    # Small shapes consistent with how this module is used in karel.py:
    # inp_embed of shape (seq, batch, hs) with hs = 32.
    S, B = 8, 2
    inp_embed = jax.random.normal(key, (S, B, HS), jnp.float32)

    # Default (short-circuit) path: exact module semantics, zero kernel work.
    out_fast = do_not_augment_with_trace_forward(inp_embed, None, trace_info=None)
    jax.block_until_ready(out_fast)
    assert out_fast.shape == inp_embed.shape
    assert out_fast.dtype == inp_embed.dtype
    assert np.array_equal(np.asarray(out_fast), np.asarray(inp_embed))

    # Kernel-boundary path: single HBM->HBM DMA identity copy.
    out_dma = do_not_augment_with_trace_forward(
        inp_embed, None, trace_info=None, force_kernel=True)
    jax.block_until_ready(out_dma)
    assert out_dma.shape == inp_embed.shape
    assert out_dma.dtype == inp_embed.dtype
    # Forward is a pure pass-through: must be bit-exact.
    assert np.array_equal(np.asarray(out_dma), np.asarray(inp_embed))

    assert output_embedding_size() == HS

    print("KERNEL_OK")
</pallas_src>

<mosaic_0001>
module attributes {stable_mosaic.version = 11 : i64} {
  func.func @_dma_identity_kernel(%arg0: memref<8x2x32xf32, #tpu.memory_space<any>>, %arg1: memref<8x2x32xf32, #tpu.memory_space<any>>, %arg2: memref<!tpu.dma_semaphore, #tpu.memory_space<semaphore_mem>>) attributes {dimension_semantics = [], scalar_prefetch = 0 : i64, scratch_operands = 1 : i64, tpu.core_type = #tpu.core_type<tc>} {
    tpu.enqueue_dma source(%arg0 : memref<8x2x32xf32, #tpu.memory_space<any>>) target(%arg1 : memref<8x2x32xf32, #tpu.memory_space<any>>) target_semaphore(%arg2 : memref<!tpu.dma_semaphore, #tpu.memory_space<semaphore_mem>>)
    tpu.wait_dma2 semaphore(%arg2 : memref<!tpu.dma_semaphore, #tpu.memory_space<semaphore_mem>>) src(%arg0 : memref<8x2x32xf32, #tpu.memory_space<any>>) dst(%arg1 : memref<8x2x32xf32, #tpu.memory_space<any>>)
    return
  }
}

</mosaic_0001>

<llo_original>
// kernel: tpu_custom_call.1
$region0: #{tpu_custom_call.1}
  #allocation0 [shape = 'u32[]', space=smem, size = 0x4, offset = 0x4, fixed_abs, tag = 'smem constant byte address 0x4 - core index']
  #allocation1 [shape = 'u32[72,128]{1,0:T(1,128)}', space=vmem, size = 0x9000, scoped, tag = 'internal scratch']
  #allocation2 [shape = 's32[1]{0}', space=sflag, size = 0x4, scoped, tag = 'scratch operand']
  #allocation3 [shape = 's32[]', space=sflag, size = 0x4, offset = 0, fixed_abs, tag = 'sflag constant byte address 0x0 - dummy sync flag']
  #allocation4 [shape = 'u32[0]{0}', space=smem, size = 0, offset = 0, fixed_abs, tag = 'smem constant byte address 0x0 - null']
  %s0 = inlined_call_operand.hbm [shape: f32[8,2,32], index: 0, kind: input, shape index: {}]
  %s1 = inlined_call_operand.hbm [shape: f32[8,2,32], index: 1, kind: output, shape index: {}]
  %s2 = sld [smem:[#allocation0]]
  $region2: #{tpu_custom_call.1} parent=0
    _
  %s4 = ssub.s32 1, %s2
  %s5 = scalar_select 0, %s4, %s2
  %s7 = sshll.u32 1, 14
  %s8 = sxor.u32 4294967295, %s7
  %s10 = sshll.u32 %s0, 4
  %s11 = int_to_ptr.hbm [resolvable:$true] %s10
  %s12 = sshll.u32 %s1, 4
  %s13 = int_to_ptr.hbm [resolvable:$true] %s12
  %16 = dma.general %s11, 256, %s13, [#allocation2], [#allocation3], [#allocation4], 0, 0
  %s17 = smul.u32 8, 2
  %s18 = smul.u32 %s17, 1
  %s19 = sshll.u32 %s18, 4
  %20 = dma.done [#allocation2], %s19
  %21 = vsyncmov [#allocation2]
  %s22 = vpop.sfrf %21
  %p23 = scmp.eq.s32.totalorder %s22, 0
  %p24 = pneg %p23
  %26 = shalt.err (%p24)

</llo_original>
